<compile_context>
chip_gen: v7x
topology: tpu7x:2x2x1
jax: 0.10.0
libtpu: 0.0.40
codegen_flags: <defaults>
</compile_context>

<pallas_src>
import jax
import jax.numpy as jnp
from jax.experimental import pallas as pl
from jax.experimental.pallas import tpu as pltpu


def wrapper_kernel(x_ref, mean_ref, inv_std_ref, w_ref, b_ref, o_ref):
    """Fused per-channel normalization + linear classifier head.

    x_ref:       (Bp, D)   flattened NCHW input (rows >= B are zero padding)
    mean_ref:    (1, D)    per-channel mean broadcast over spatial positions
    inv_std_ref: (1, D)    per-channel 1/std broadcast over spatial positions
    w_ref:       (D, Np)   classifier weight, bf16, lane-padded to Np
    b_ref:       (1, Np)   classifier bias, f32, lane-padded
    o_ref:       (Bp, Np)  logits (lane/sublane-dense)
    """
    # Elementwise normalize in f32 on the VPU (multiply by precomputed 1/std).
    xn = (x_ref[...] - mean_ref[...]) * inv_std_ref[...]
    # bf16 MXU matmul with f32 accumulation.
    logits = jnp.dot(xn.astype(jnp.bfloat16), w_ref[...],
                     preferred_element_type=jnp.float32)
    o_ref[...] = (logits + b_ref[...]).astype(o_ref.dtype)


def _round_up(v, m):
    return (v + m - 1) // m * m


@jax.jit
def wrapper_model_forward(x, mean, std, w, b):
    """JAX equivalent of WrapperModel.forward for inc=False / name='torch',
    with the wrapped `model` = flatten + Linear(D, N)."""
    B, C, H, W = x.shape
    D = C * H * W
    N = w.shape[1]

    # Lane/sublane-dense padded shapes for the kernel.
    B_pad = _round_up(max(B, 8), 8)          # sublane multiple
    N_pad = _round_up(max(N, 128), 128)      # lane multiple

    # --- one-time layout glue (compiled once under jit) -------------------
    x2 = jnp.zeros((B_pad, D), x.dtype).at[:B, :].set(x.reshape(B, D))
    mean_row = jnp.repeat(mean.astype(jnp.float32), H * W).reshape(1, D)
    inv_std_row = (1.0 / jnp.repeat(std.astype(jnp.float32), H * W)).reshape(1, D)
    w_pad = jnp.zeros((D, N_pad), jnp.bfloat16).at[:, :N].set(
        w.astype(jnp.bfloat16))
    b_pad = jnp.zeros((1, N_pad), jnp.float32).at[:, :N].set(
        b.astype(jnp.float32))
    # -----------------------------------------------------------------------

    vmem = pl.BlockSpec(memory_space=pltpu.MemorySpace.VMEM)
    out_pad = pl.pallas_call(
        wrapper_kernel,
        out_shape=jax.ShapeDtypeStruct((B_pad, N_pad), x.dtype),
        in_specs=[vmem] * 5,
        out_specs=vmem,
    )(x2, mean_row, inv_std_row, w_pad, b_pad)

    return out_pad[:B, :N]


if __name__ == "__main__":
    B, C, H, W = 2, 4, 16, 16
    N = 16                      # number of classes of the wrapped linear model
    D = C * H * W

    key = jax.random.PRNGKey(0)
    kx, kw, kb = jax.random.split(key, 3)
    x = jax.random.uniform(kx, (B, C, H, W), dtype=jnp.float32)

    # Deterministic per-channel normalization statistics (ImageNet-like).
    mean = jnp.array([0.485, 0.456, 0.406, 0.5], dtype=jnp.float32)
    std = jnp.array([0.229, 0.224, 0.225, 0.25], dtype=jnp.float32)

    # Deterministic inner-model (Linear) parameters.
    w = jax.random.normal(kw, (D, N), dtype=jnp.float32) * 0.02
    b = jax.random.normal(kb, (N,), dtype=jnp.float32) * 0.01

    out = jax.block_until_ready(wrapper_model_forward(x, mean, std, w, b))

    # Plain-JAX f32 reference (mirrors the PyTorch broadcasting).
    xn_ref = (x - mean[None, :, None, None]) / std[None, :, None, None]
    ref = xn_ref.reshape(B, D) @ w + b[None, :]
    assert out.shape == (B, N)
    # Tolerance loosened for the bf16 MXU inputs (f32 accumulation).
    assert jnp.allclose(out, ref, atol=3e-2, rtol=3e-2), "mismatch vs reference"

    # TODO(synk): inc=True branch (nearest Resize to 299x299 + x*2-1, plus the
    # 'tf' [:, 1:] slicing) and name=='tnt' branch are not exercised here.
    print("KERNEL_OK")
</pallas_src>

<mosaic_0001>
module attributes {stable_mosaic.version = 11 : i64} {
  func.func @wrapper_kernel(%arg0: memref<8x1024xf32, #tpu.memory_space<vmem>>, %arg1: memref<1x1024xf32, #tpu.memory_space<vmem>>, %arg2: memref<1x1024xf32, #tpu.memory_space<vmem>>, %arg3: memref<1024x128xbf16, #tpu.memory_space<vmem>>, %arg4: memref<1x128xf32, #tpu.memory_space<vmem>>, %arg5: memref<8x128xf32, #tpu.memory_space<vmem>>) attributes {dimension_semantics = [], scalar_prefetch = 0 : i64, scratch_operands = 0 : i64, tpu.core_type = #tpu.core_type<tc>} {
    %c0 = arith.constant 0 : index
    %c0_0 = arith.constant 0 : index
    %0 = vector.load %arg0[%c0, %c0_0] : memref<8x1024xf32, #tpu.memory_space<vmem>>, vector<8x1024xf32>
    %c0_1 = arith.constant 0 : index
    %c0_2 = arith.constant 0 : index
    %1 = vector.load %arg1[%c0_1, %c0_2] : memref<1x1024xf32, #tpu.memory_space<vmem>>, vector<1x1024xf32>
    %2 = vector.broadcast %1 : vector<1x1024xf32> to vector<8x1024xf32>
    %3 = arith.subf %0, %2 : vector<8x1024xf32>
    %c0_3 = arith.constant 0 : index
    %c0_4 = arith.constant 0 : index
    %4 = vector.load %arg2[%c0_3, %c0_4] : memref<1x1024xf32, #tpu.memory_space<vmem>>, vector<1x1024xf32>
    %5 = vector.broadcast %4 : vector<1x1024xf32> to vector<8x1024xf32>
    %6 = arith.mulf %3, %5 : vector<8x1024xf32>
    %7 = arith.truncf %6 : vector<8x1024xf32> to vector<8x1024xbf16>
    %c0_5 = arith.constant 0 : index
    %c0_6 = arith.constant 0 : index
    %8 = vector.load %arg3[%c0_5, %c0_6] : memref<1024x128xbf16, #tpu.memory_space<vmem>>, vector<1024x128xbf16>
    %cst = arith.constant dense<0.000000e+00> : vector<8x128xf32>
    %9 = tpu.matmul %7, %8, %cst {dimension_numbers = #tpu.dot_dimension_numbers<[1], [0], [0], [1], [0, 0, 1, 1], [], []>} : vector<8x1024xbf16>, vector<1024x128xbf16>, vector<8x128xf32> -> vector<8x128xf32>
    %c0_7 = arith.constant 0 : index
    %c0_8 = arith.constant 0 : index
    %10 = vector.load %arg4[%c0_7, %c0_8] : memref<1x128xf32, #tpu.memory_space<vmem>>, vector<1x128xf32>
    %11 = vector.broadcast %10 : vector<1x128xf32> to vector<8x128xf32>
    %12 = arith.addf %9, %11 : vector<8x128xf32>
    %c0_9 = arith.constant 0 : index
    %c0_10 = arith.constant 0 : index
    %13 = vector.load %arg5[%c0_9, %c0_10] : memref<8x128xf32, #tpu.memory_space<vmem>>, vector<8x128xf32>
    tpu.vector_store %arg5[%c0_9, %c0_10], %12 {strides = array<i32>} : memref<8x128xf32, #tpu.memory_space<vmem>>, vector<8x128xf32>,
    return
  }
}

</mosaic_0001>

<llo_original>
// kernel: wrapper_model_forward.1
$region0: #{wrapper_model_forward.1}
  #allocation0 [shape = 'u32[]', space=smem, size = 0x4, offset = 0x4, fixed_abs, tag = 'smem constant byte address 0x4 - core index']
  #allocation1 [shape = 'u32[144,128]{1,0:T(1,128)}', space=vmem, size = 0x12000, scoped, tag = 'internal scratch']
  %s0 = inlined_call_operand.vmem [shape: f32[8,1024], index: 0, kind: input, shape index: {}]
  %s1 = inlined_call_operand.vmem [shape: f32[1,1024], index: 1, kind: input, shape index: {}]
  %s2 = inlined_call_operand.vmem [shape: f32[1,1024], index: 2, kind: input, shape index: {}]
  %s3 = inlined_call_operand.vmem [shape: bf16[1024,128], index: 3, kind: input, shape index: {}]
  %s4 = inlined_call_operand.vmem [shape: f32[1,128], index: 4, kind: input, shape index: {}]
  %s5 = inlined_call_operand.vmem [shape: f32[8,128], index: 5, kind: output, shape index: {}]
  %s6 = sld [smem:[#allocation0]]
  $region30: #{wrapper_model_forward.1} parent=0
    _
  %s8 = ssub.s32 1, %s6
  %s9 = scalar_select 0, %s8, %s6
  // Predicated region
  $region2: #{wrapper_model_forward.1} parent=0 // pred_check
    _
  $region3: #{wrapper_model_forward.1} parent=0 // pred_check_branch
    %11 = sbr.rel (0) target = $region5
  $region4: #{wrapper_model_forward.1} parent=0 // pred_region
    _
  $region5: #{wrapper_model_forward.1} parent=0 // pred_fallthru
    _
  // Predicated region
  $region6: #{wrapper_model_forward.1} parent=0 // pred_check
    _
  $region7: #{wrapper_model_forward.1} parent=0 // pred_check_branch
    %13 = sbr.rel (0) target = $region9
  $region8: #{wrapper_model_forward.1} parent=0 // pred_region
    _
  $region9: #{wrapper_model_forward.1} parent=0 // pred_fallthru
    _
  // Predicated region
  $region10: #{wrapper_model_forward.1} parent=0 // pred_check
    _
  $region11: #{wrapper_model_forward.1} parent=0 // pred_check_branch
    %15 = sbr.rel (0) target = $region13
  $region12: #{wrapper_model_forward.1} parent=0 // pred_region
    _
  $region13: #{wrapper_model_forward.1} parent=0 // pred_fallthru
    _
  // Predicated region
  $region14: #{wrapper_model_forward.1} parent=0 // pred_check
    _
  $region15: #{wrapper_model_forward.1} parent=0 // pred_check_branch
    %17 = sbr.rel (0) target = $region17
  $region16: #{wrapper_model_forward.1} parent=0 // pred_region
    _
  $region17: #{wrapper_model_forward.1} parent=0 // pred_fallthru
    _
  // Predicated region
  $region18: #{wrapper_model_forward.1} parent=0 // pred_check
    _
  $region19: #{wrapper_model_forward.1} parent=0 // pred_check_branch
    %19 = sbr.rel (0) target = $region21
  $region20: #{wrapper_model_forward.1} parent=0 // pred_region
    _
  $region21: #{wrapper_model_forward.1} parent=0 // pred_fallthru
    _
  %v21 = vld [vmem:[%s0] sm:$0xff]
  %v22 = vld [vmem:[%s0 + $0x8] sm:$0xff]
  %v23 = vld [vmem:[%s0 + $0x10] sm:$0xff]
  %v24 = vld [vmem:[%s0 + $0x18] sm:$0xff]
  %v25 = vld [vmem:[%s0 + $0x20] sm:$0xff]
  %v26 = vld [vmem:[%s0 + $0x28] sm:$0xff]
  %v27 = vld [vmem:[%s0 + $0x30] sm:$0xff]
  %v28 = vld [vmem:[%s0 + $0x38] sm:$0xff]
  %v29 = vld [vmem:[%s1] sm:$0xff]
  %v31 = vlaneseq
  %v32 = vshrl.u32 %v31, 7
  %v33 = vsub.s32 0, %v32
  %v34 = vrot.slane %v29, %v33
  %v35 = vlaneseq
  %v36 = vshrl.u32 %v35, 7
  %v37 = vsub.s32 1, %v36
  %v38 = vrot.slane %v29, %v37
  %v39 = vlaneseq
  %v40 = vshrl.u32 %v39, 7
  %v41 = vsub.s32 2, %v40
  %v42 = vrot.slane %v29, %v41
  %v43 = vlaneseq
  %v44 = vshrl.u32 %v43, 7
  %v45 = vsub.s32 3, %v44
  %v46 = vrot.slane %v29, %v45
  %v47 = vlaneseq
  %v48 = vshrl.u32 %v47, 7
  %v49 = vsub.s32 4, %v48
  %v50 = vrot.slane %v29, %v49
  %v51 = vlaneseq
  %v52 = vshrl.u32 %v51, 7
  %v53 = vsub.s32 5, %v52
  %v54 = vrot.slane %v29, %v53
  %v55 = vlaneseq
  %v56 = vshrl.u32 %v55, 7
  %v57 = vsub.s32 6, %v56
  %v58 = vrot.slane %v29, %v57
  %v59 = vlaneseq
  %v60 = vshrl.u32 %v59, 7
  %v61 = vsub.s32 7, %v60
  %v62 = vrot.slane %v29, %v61
  %v71 = vsub.f32 %v21, %v34
  %v72 = vsub.f32 %v22, %v38
  %v73 = vsub.f32 %v23, %v42
  %v74 = vsub.f32 %v24, %v46
  %v75 = vsub.f32 %v25, %v50
  %v76 = vsub.f32 %v26, %v54
  %v77 = vsub.f32 %v27, %v58
  %v78 = vsub.f32 %v28, %v62
  %v79 = vld [vmem:[%s2] sm:$0xff]
  %v81 = vlaneseq
  %v82 = vshrl.u32 %v81, 7
  %v83 = vsub.s32 0, %v82
  %v84 = vrot.slane %v79, %v83
  %v85 = vlaneseq
  %v86 = vshrl.u32 %v85, 7
  %v87 = vsub.s32 1, %v86
  %v88 = vrot.slane %v79, %v87
  %v89 = vlaneseq
  %v90 = vshrl.u32 %v89, 7
  %v91 = vsub.s32 2, %v90
  %v92 = vrot.slane %v79, %v91
  %v93 = vlaneseq
  %v94 = vshrl.u32 %v93, 7
  %v95 = vsub.s32 3, %v94
  %v96 = vrot.slane %v79, %v95
  %v97 = vlaneseq
  %v98 = vshrl.u32 %v97, 7
  %v99 = vsub.s32 4, %v98
  %v100 = vrot.slane %v79, %v99
  %v101 = vlaneseq
  %v102 = vshrl.u32 %v101, 7
  %v103 = vsub.s32 5, %v102
  %v104 = vrot.slane %v79, %v103
  %v105 = vlaneseq
  %v106 = vshrl.u32 %v105, 7
  %v107 = vsub.s32 6, %v106
  %v108 = vrot.slane %v79, %v107
  %v109 = vlaneseq
  %v110 = vshrl.u32 %v109, 7
  %v111 = vsub.s32 7, %v110
  %v112 = vrot.slane %v79, %v111
  %v121 = vmul.f32 %v71, %v84
  %v122 = vmul.f32 %v72, %v88
  %v123 = vmul.f32 %v73, %v92
  %v124 = vmul.f32 %v74, %v96
  %v125 = vmul.f32 %v75, %v100
  %v126 = vmul.f32 %v76, %v104
  %v127 = vmul.f32 %v77, %v108
  %v128 = vmul.f32 %v78, %v112
  %v129 = vpack.c.bf16 %v121, %v121
  %v130 = vpack.c.bf16 %v122, %v122
  %v131 = vpack.c.bf16 %v123, %v123
  %v132 = vpack.c.bf16 %v124, %v124
  %v133 = vpack.c.bf16 %v125, %v125
  %v134 = vpack.c.bf16 %v126, %v126
  %v135 = vpack.c.bf16 %v127, %v127
  %v136 = vpack.c.bf16 %v128, %v128
  %v137 = vld [vmem:[%s3] sm:$0xf]
  %v138 = vld [vmem:[%s3 + $0x4] sm:$0xf]
  %v139 = vld [vmem:[%s3 + $0x8] sm:$0xf]
  %v140 = vld [vmem:[%s3 + $0xc] sm:$0xf]
  %v141 = vld [vmem:[%s3 + $0x10] sm:$0xf]
  %v142 = vld [vmem:[%s3 + $0x14] sm:$0xf]
  %v143 = vld [vmem:[%s3 + $0x18] sm:$0xf]
  %v144 = vld [vmem:[%s3 + $0x1c] sm:$0xf]
  %v145 = vld [vmem:[%s3 + $0x20] sm:$0xf]
  %v146 = vld [vmem:[%s3 + $0x24] sm:$0xf]
  %v147 = vld [vmem:[%s3 + $0x28] sm:$0xf]
  %v148 = vld [vmem:[%s3 + $0x2c] sm:$0xf]
  %v149 = vld [vmem:[%s3 + $0x30] sm:$0xf]
  %v150 = vld [vmem:[%s3 + $0x34] sm:$0xf]
  %v151 = vld [vmem:[%s3 + $0x38] sm:$0xf]
  %v152 = vld [vmem:[%s3 + $0x3c] sm:$0xf]
  %v153 = vld [vmem:[%s3 + $0x40] sm:$0xf]
  %v154 = vld [vmem:[%s3 + $0x44] sm:$0xf]
  %v155 = vld [vmem:[%s3 + $0x48] sm:$0xf]
  %v156 = vld [vmem:[%s3 + $0x4c] sm:$0xf]
  %v157 = vld [vmem:[%s3 + $0x50] sm:$0xf]
  %v158 = vld [vmem:[%s3 + $0x54] sm:$0xf]
  %v159 = vld [vmem:[%s3 + $0x58] sm:$0xf]
  %v160 = vld [vmem:[%s3 + $0x5c] sm:$0xf]
  %v161 = vld [vmem:[%s3 + $0x60] sm:$0xf]
  %v162 = vld [vmem:[%s3 + $0x64] sm:$0xf]
  %v163 = vld [vmem:[%s3 + $0x68] sm:$0xf]
  %v164 = vld [vmem:[%s3 + $0x6c] sm:$0xf]
  %v165 = vld [vmem:[%s3 + $0x70] sm:$0xf]
  %v166 = vld [vmem:[%s3 + $0x74] sm:$0xf]
  %v167 = vld [vmem:[%s3 + $0x78] sm:$0xf]
  %v168 = vld [vmem:[%s3 + $0x7c] sm:$0xf]
  %v169 = vld [vmem:[%s3 + $0x80] sm:$0xf]
  %v170 = vld [vmem:[%s3 + $0x84] sm:$0xf]
  %v171 = vld [vmem:[%s3 + $0x88] sm:$0xf]
  %v172 = vld [vmem:[%s3 + $0x8c] sm:$0xf]
  %v173 = vld [vmem:[%s3 + $0x90] sm:$0xf]
  %v174 = vld [vmem:[%s3 + $0x94] sm:$0xf]
  %v175 = vld [vmem:[%s3 + $0x98] sm:$0xf]
  %v176 = vld [vmem:[%s3 + $0x9c] sm:$0xf]
  %v177 = vld [vmem:[%s3 + $0xa0] sm:$0xf]
  %v178 = vld [vmem:[%s3 + $0xa4] sm:$0xf]
  %v179 = vld [vmem:[%s3 + $0xa8] sm:$0xf]
  %v180 = vld [vmem:[%s3 + $0xac] sm:$0xf]
  %v181 = vld [vmem:[%s3 + $0xb0] sm:$0xf]
  %v182 = vld [vmem:[%s3 + $0xb4] sm:$0xf]
  %v183 = vld [vmem:[%s3 + $0xb8] sm:$0xf]
  %v184 = vld [vmem:[%s3 + $0xbc] sm:$0xf]
  %v185 = vld [vmem:[%s3 + $0xc0] sm:$0xf]
  %v186 = vld [vmem:[%s3 + $0xc4] sm:$0xf]
  %v187 = vld [vmem:[%s3 + $0xc8] sm:$0xf]
  %v188 = vld [vmem:[%s3 + $0xcc] sm:$0xf]
  %v189 = vld [vmem:[%s3 + $0xd0] sm:$0xf]
  %v190 = vld [vmem:[%s3 + $0xd4] sm:$0xf]
  %v191 = vld [vmem:[%s3 + $0xd8] sm:$0xf]
  %v192 = vld [vmem:[%s3 + $0xdc] sm:$0xf]
  %v193 = vld [vmem:[%s3 + $0xe0] sm:$0xf]
  %v194 = vld [vmem:[%s3 + $0xe4] sm:$0xf]
  %v195 = vld [vmem:[%s3 + $0xe8] sm:$0xf]
  %v196 = vld [vmem:[%s3 + $0xec] sm:$0xf]
  %v197 = vld [vmem:[%s3 + $0xf0] sm:$0xf]
  %v198 = vld [vmem:[%s3 + $0xf4] sm:$0xf]
  %v199 = vld [vmem:[%s3 + $0xf8] sm:$0xf]
  %v200 = vld [vmem:[%s3 + $0xfc] sm:$0xf]
  %v201 = vld [vmem:[%s3 + $0x100] sm:$0xf]
  %v202 = vld [vmem:[%s3 + $0x104] sm:$0xf]
  %v203 = vld [vmem:[%s3 + $0x108] sm:$0xf]
  %v204 = vld [vmem:[%s3 + $0x10c] sm:$0xf]
  %v205 = vld [vmem:[%s3 + $0x110] sm:$0xf]
  %v206 = vld [vmem:[%s3 + $0x114] sm:$0xf]
  %v207 = vld [vmem:[%s3 + $0x118] sm:$0xf]
  %v208 = vld [vmem:[%s3 + $0x11c] sm:$0xf]
  %v209 = vld [vmem:[%s3 + $0x120] sm:$0xf]
  %v210 = vld [vmem:[%s3 + $0x124] sm:$0xf]
  %v211 = vld [vmem:[%s3 + $0x128] sm:$0xf]
  %v212 = vld [vmem:[%s3 + $0x12c] sm:$0xf]
  %v213 = vld [vmem:[%s3 + $0x130] sm:$0xf]
  %v214 = vld [vmem:[%s3 + $0x134] sm:$0xf]
  %v215 = vld [vmem:[%s3 + $0x138] sm:$0xf]
  %v216 = vld [vmem:[%s3 + $0x13c] sm:$0xf]
  %v217 = vld [vmem:[%s3 + $0x140] sm:$0xf]
  %v218 = vld [vmem:[%s3 + $0x144] sm:$0xf]
  %v219 = vld [vmem:[%s3 + $0x148] sm:$0xf]
  %v220 = vld [vmem:[%s3 + $0x14c] sm:$0xf]
  %v221 = vld [vmem:[%s3 + $0x150] sm:$0xf]
  %v222 = vld [vmem:[%s3 + $0x154] sm:$0xf]
  %v223 = vld [vmem:[%s3 + $0x158] sm:$0xf]
  %v224 = vld [vmem:[%s3 + $0x15c] sm:$0xf]
  %v225 = vld [vmem:[%s3 + $0x160] sm:$0xf]
  %v226 = vld [vmem:[%s3 + $0x164] sm:$0xf]
  %v227 = vld [vmem:[%s3 + $0x168] sm:$0xf]
  %v228 = vld [vmem:[%s3 + $0x16c] sm:$0xf]
  %v229 = vld [vmem:[%s3 + $0x170] sm:$0xf]
  %v230 = vld [vmem:[%s3 + $0x174] sm:$0xf]
  %v231 = vld [vmem:[%s3 + $0x178] sm:$0xf]
  %v232 = vld [vmem:[%s3 + $0x17c] sm:$0xf]
  %v233 = vld [vmem:[%s3 + $0x180] sm:$0xf]
  %v234 = vld [vmem:[%s3 + $0x184] sm:$0xf]
  %v235 = vld [vmem:[%s3 + $0x188] sm:$0xf]
  %v236 = vld [vmem:[%s3 + $0x18c] sm:$0xf]
  %v237 = vld [vmem:[%s3 + $0x190] sm:$0xf]
  %v238 = vld [vmem:[%s3 + $0x194] sm:$0xf]
  %v239 = vld [vmem:[%s3 + $0x198] sm:$0xf]
  %v240 = vld [vmem:[%s3 + $0x19c] sm:$0xf]
  %v241 = vld [vmem:[%s3 + $0x1a0] sm:$0xf]
  %v242 = vld [vmem:[%s3 + $0x1a4] sm:$0xf]
  %v243 = vld [vmem:[%s3 + $0x1a8] sm:$0xf]
  %v244 = vld [vmem:[%s3 + $0x1ac] sm:$0xf]
  %v245 = vld [vmem:[%s3 + $0x1b0] sm:$0xf]
  %v246 = vld [vmem:[%s3 + $0x1b4] sm:$0xf]
  %v247 = vld [vmem:[%s3 + $0x1b8] sm:$0xf]
  %v248 = vld [vmem:[%s3 + $0x1bc] sm:$0xf]
  %v249 = vld [vmem:[%s3 + $0x1c0] sm:$0xf]
  %v250 = vld [vmem:[%s3 + $0x1c4] sm:$0xf]
  %v251 = vld [vmem:[%s3 + $0x1c8] sm:$0xf]
  %v252 = vld [vmem:[%s3 + $0x1cc] sm:$0xf]
  %v253 = vld [vmem:[%s3 + $0x1d0] sm:$0xf]
  %v254 = vld [vmem:[%s3 + $0x1d4] sm:$0xf]
  %v255 = vld [vmem:[%s3 + $0x1d8] sm:$0xf]
  %v256 = vld [vmem:[%s3 + $0x1dc] sm:$0xf]
  %v257 = vld [vmem:[%s3 + $0x1e0] sm:$0xf]
  %v258 = vld [vmem:[%s3 + $0x1e4] sm:$0xf]
  %v259 = vld [vmem:[%s3 + $0x1e8] sm:$0xf]
  %v260 = vld [vmem:[%s3 + $0x1ec] sm:$0xf]
  %v261 = vld [vmem:[%s3 + $0x1f0] sm:$0xf]
  %v262 = vld [vmem:[%s3 + $0x1f4] sm:$0xf]
  %v263 = vld [vmem:[%s3 + $0x1f8] sm:$0xf]
  %v264 = vld [vmem:[%s3 + $0x1fc] sm:$0xf]
  %v265 = vld [vmem:[%s4] sm:$0x1]
  %v267 = vlaneseq
  %v268 = vshrl.u32 %v267, 7
  %v269 = vsub.s32 0, %v268
  %v270 = vrot.slane %v265, %v269
  %v400 = vunpack.c.l.b16 %v137
  %v401 = vunpack.c.l.b16 %v138
  %v402 = vunpack.c.l.b16 %v139
  %v403 = vunpack.c.l.b16 %v140
  %v404 = vunpack.c.l.b16 %v141
  %v405 = vunpack.c.l.b16 %v142
  %v406 = vunpack.c.l.b16 %v143
  %v407 = vunpack.c.l.b16 %v144
  %v408 = vunpack.c.l.b16 %v145
  %v409 = vunpack.c.l.b16 %v146
  %v410 = vunpack.c.l.b16 %v147
  %v411 = vunpack.c.l.b16 %v148
  %v412 = vunpack.c.l.b16 %v149
  %v413 = vunpack.c.l.b16 %v150
  %v414 = vunpack.c.l.b16 %v151
  %v415 = vunpack.c.l.b16 %v152
  %v416 = vunpack.c.l.b16 %v153
  %v417 = vunpack.c.l.b16 %v154
  %v418 = vunpack.c.l.b16 %v155
  %v419 = vunpack.c.l.b16 %v156
  %v420 = vunpack.c.l.b16 %v157
  %v421 = vunpack.c.l.b16 %v158
  %v422 = vunpack.c.l.b16 %v159
  %v423 = vunpack.c.l.b16 %v160
  %v424 = vunpack.c.l.b16 %v161
  %v425 = vunpack.c.l.b16 %v162
  %v426 = vunpack.c.l.b16 %v163
  %v427 = vunpack.c.l.b16 %v164
  %v428 = vunpack.c.l.b16 %v165
  %v429 = vunpack.c.l.b16 %v166
  %v430 = vunpack.c.l.b16 %v167
  %v431 = vunpack.c.l.b16 %v168
  %v432 = vunpack.c.l.b16 %v169
  %v433 = vunpack.c.l.b16 %v170
  %v434 = vunpack.c.l.b16 %v171
  %v435 = vunpack.c.l.b16 %v172
  %v436 = vunpack.c.l.b16 %v173
  %v437 = vunpack.c.l.b16 %v174
  %v438 = vunpack.c.l.b16 %v175
  %v439 = vunpack.c.l.b16 %v176
  %v440 = vunpack.c.l.b16 %v177
  %v441 = vunpack.c.l.b16 %v178
  %v442 = vunpack.c.l.b16 %v179
  %v443 = vunpack.c.l.b16 %v180
  %v444 = vunpack.c.l.b16 %v181
  %v445 = vunpack.c.l.b16 %v182
  %v446 = vunpack.c.l.b16 %v183
  %v447 = vunpack.c.l.b16 %v184
  %v448 = vunpack.c.l.b16 %v185
  %v449 = vunpack.c.l.b16 %v186
  %v450 = vunpack.c.l.b16 %v187
  %v451 = vunpack.c.l.b16 %v188
  %v452 = vunpack.c.l.b16 %v189
  %v453 = vunpack.c.l.b16 %v190
  %v454 = vunpack.c.l.b16 %v191
  %v455 = vunpack.c.l.b16 %v192
  %v456 = vunpack.c.l.b16 %v193
  %v457 = vunpack.c.l.b16 %v194
  %v458 = vunpack.c.l.b16 %v195
  %v459 = vunpack.c.l.b16 %v196
  %v460 = vunpack.c.l.b16 %v197
  %v461 = vunpack.c.l.b16 %v198
  %v462 = vunpack.c.l.b16 %v199
  %v463 = vunpack.c.l.b16 %v200
  %v464 = vunpack.c.l.b16 %v201
  %v465 = vunpack.c.l.b16 %v202
  %v466 = vunpack.c.l.b16 %v203
  %v467 = vunpack.c.l.b16 %v204
  %v468 = vunpack.c.l.b16 %v205
  %v469 = vunpack.c.l.b16 %v206
  %v470 = vunpack.c.l.b16 %v207
  %v471 = vunpack.c.l.b16 %v208
  %v472 = vunpack.c.l.b16 %v209
  %v473 = vunpack.c.l.b16 %v210
  %v474 = vunpack.c.l.b16 %v211
  %v475 = vunpack.c.l.b16 %v212
  %v476 = vunpack.c.l.b16 %v213
  %v477 = vunpack.c.l.b16 %v214
  %v478 = vunpack.c.l.b16 %v215
  %v479 = vunpack.c.l.b16 %v216
  %v480 = vunpack.c.l.b16 %v217
  %v481 = vunpack.c.l.b16 %v218
  %v482 = vunpack.c.l.b16 %v219
  %v483 = vunpack.c.l.b16 %v220
  %v484 = vunpack.c.l.b16 %v221
  %v485 = vunpack.c.l.b16 %v222
  %v486 = vunpack.c.l.b16 %v223
  %v487 = vunpack.c.l.b16 %v224
  %v488 = vunpack.c.l.b16 %v225
  %v489 = vunpack.c.l.b16 %v226
  %v490 = vunpack.c.l.b16 %v227
  %v491 = vunpack.c.l.b16 %v228
  %v492 = vunpack.c.l.b16 %v229
  %v493 = vunpack.c.l.b16 %v230
  %v494 = vunpack.c.l.b16 %v231
  %v495 = vunpack.c.l.b16 %v232
  %v496 = vunpack.c.l.b16 %v233
  %v497 = vunpack.c.l.b16 %v234
  %v498 = vunpack.c.l.b16 %v235
  %v499 = vunpack.c.l.b16 %v236
  %v500 = vunpack.c.l.b16 %v237
  %v501 = vunpack.c.l.b16 %v238
  %v502 = vunpack.c.l.b16 %v239
  %v503 = vunpack.c.l.b16 %v240
  %v504 = vunpack.c.l.b16 %v241
  %v505 = vunpack.c.l.b16 %v242
  %v506 = vunpack.c.l.b16 %v243
  %v507 = vunpack.c.l.b16 %v244
  %v508 = vunpack.c.l.b16 %v245
  %v509 = vunpack.c.l.b16 %v246
  %v510 = vunpack.c.l.b16 %v247
  %v511 = vunpack.c.l.b16 %v248
  %v512 = vunpack.c.l.b16 %v249
  %v513 = vunpack.c.l.b16 %v250
  %v514 = vunpack.c.l.b16 %v251
  %v515 = vunpack.c.l.b16 %v252
  %v516 = vunpack.c.l.b16 %v253
  %v517 = vunpack.c.l.b16 %v254
  %v518 = vunpack.c.l.b16 %v255
  %v519 = vunpack.c.l.b16 %v256
  %v520 = vunpack.c.l.b16 %v257
  %v521 = vunpack.c.l.b16 %v258
  %v522 = vunpack.c.l.b16 %v259
  %v523 = vunpack.c.l.b16 %v260
  %v524 = vunpack.c.l.b16 %v261
  %v525 = vunpack.c.l.b16 %v262
  %v526 = vunpack.c.l.b16 %v263
  %v527 = vunpack.c.l.b16 %v264
  %v528 = vpack.c.b16 %v401, %v400
  %v529 = vpack.c.b16 %v403, %v402
  %v530 = vpack.c.b16 %v405, %v404
  %v531 = vpack.c.b16 %v407, %v406
  %v532 = vpack.c.b16 %v409, %v408
  %v533 = vpack.c.b16 %v411, %v410
  %v534 = vpack.c.b16 %v413, %v412
  %v535 = vpack.c.b16 %v415, %v414
  %v536 = vpack.c.b16 %v417, %v416
  %v537 = vpack.c.b16 %v419, %v418
  %v538 = vpack.c.b16 %v421, %v420
  %v539 = vpack.c.b16 %v423, %v422
  %v540 = vpack.c.b16 %v425, %v424
  %v541 = vpack.c.b16 %v427, %v426
  %v542 = vpack.c.b16 %v429, %v428
  %v543 = vpack.c.b16 %v431, %v430
  %v544 = vpack.c.b16 %v433, %v432
  %v545 = vpack.c.b16 %v435, %v434
  %v546 = vpack.c.b16 %v437, %v436
  %v547 = vpack.c.b16 %v439, %v438
  %v548 = vpack.c.b16 %v441, %v440
  %v549 = vpack.c.b16 %v443, %v442
  %v550 = vpack.c.b16 %v445, %v444
  %v551 = vpack.c.b16 %v447, %v446
  %v552 = vpack.c.b16 %v449, %v448
  %v553 = vpack.c.b16 %v451, %v450
  %v554 = vpack.c.b16 %v453, %v452
  %v555 = vpack.c.b16 %v455, %v454
  %v556 = vpack.c.b16 %v457, %v456
  %v557 = vpack.c.b16 %v459, %v458
  %v558 = vpack.c.b16 %v461, %v460
  %v559 = vpack.c.b16 %v463, %v462
  %v560 = vpack.c.b16 %v465, %v464
  %v561 = vpack.c.b16 %v467, %v466
  %v562 = vpack.c.b16 %v469, %v468
  %v563 = vpack.c.b16 %v471, %v470
  %v564 = vpack.c.b16 %v473, %v472
  %v565 = vpack.c.b16 %v475, %v474
  %v566 = vpack.c.b16 %v477, %v476
  %v567 = vpack.c.b16 %v479, %v478
  %v568 = vpack.c.b16 %v481, %v480
  %v569 = vpack.c.b16 %v483, %v482
  %v570 = vpack.c.b16 %v485, %v484
  %v571 = vpack.c.b16 %v487, %v486
  %v572 = vpack.c.b16 %v489, %v488
  %v573 = vpack.c.b16 %v491, %v490
  %v574 = vpack.c.b16 %v493, %v492
  %v575 = vpack.c.b16 %v495, %v494
  %v576 = vpack.c.b16 %v497, %v496
  %v577 = vpack.c.b16 %v499, %v498
  %v578 = vpack.c.b16 %v501, %v500
  %v579 = vpack.c.b16 %v503, %v502
  %v580 = vpack.c.b16 %v505, %v504
  %v581 = vpack.c.b16 %v507, %v506
  %v582 = vpack.c.b16 %v509, %v508
  %v583 = vpack.c.b16 %v511, %v510
  %v584 = vpack.c.b16 %v513, %v512
  %v585 = vpack.c.b16 %v515, %v514
  %v586 = vpack.c.b16 %v517, %v516
  %v587 = vpack.c.b16 %v519, %v518
  %v588 = vpack.c.b16 %v521, %v520
  %v589 = vpack.c.b16 %v523, %v522
  %v590 = vpack.c.b16 %v525, %v524
  %v591 = vpack.c.b16 %v527, %v526
  %656 = vmatprep.subr.bf16.mxu0 0
  %657 = vmatpush1.bf16.msra.mxu0 %v528
  %658 = vmatprep.subr.bf16.mxu0 0
  %659 = vmatpush1.bf16.msra.mxu0 %v529
  %660 = vmatprep.subr.bf16.mxu0 0
  %661 = vmatpush1.bf16.msra.mxu0 %v530
  %662 = vmatprep.subr.bf16.mxu0 0
  %663 = vmatpush1.bf16.msra.mxu0 %v531
  %664 = vmatprep.subr.bf16.mxu0 0
  %665 = vmatpush1.bf16.msra.mxu0 %v532
  %666 = vmatprep.subr.bf16.mxu0 0
  %667 = vmatpush1.bf16.msra.mxu0 %v533
  %668 = vmatprep.subr.bf16.mxu0 0
  %669 = vmatpush1.bf16.msra.mxu0 %v534
  %670 = vmatprep.subr.bf16.mxu0 0
  %671 = vmatpush1.bf16.msra.mxu0 %v535
  %672 = vmatprep.subr.bf16.mxu0 0
  %673 = vmatpush1.bf16.msra.mxu0 %v536
  %674 = vmatprep.subr.bf16.mxu0 0
  %675 = vmatpush1.bf16.msra.mxu0 %v537
  %676 = vmatprep.subr.bf16.mxu0 0
  %677 = vmatpush1.bf16.msra.mxu0 %v538
  %678 = vmatprep.subr.bf16.mxu0 0
  %679 = vmatpush1.bf16.msra.mxu0 %v539
  %680 = vmatprep.subr.bf16.mxu0 0
  %681 = vmatpush1.bf16.msra.mxu0 %v540
  %682 = vmatprep.subr.bf16.mxu0 0
  %683 = vmatpush1.bf16.msra.mxu0 %v541
  %684 = vmatprep.subr.bf16.mxu0 0
  %685 = vmatpush1.bf16.msra.mxu0 %v542
  %686 = vmatprep.subr.bf16.mxu0 0
  %687 = vmatpush1.bf16.msra.mxu0 %v543
  %688 = vmatprep.mubr.bf16.mxu0 %v130
  %689 = vmatmul.mubr.bf16.gmra.mrb[0].mxu0 %v129
  %v690 = vpop.f32.mrb[0].mxu0
  %v691 = vadd.f32 %v270, %v690
  %v692 = vpop.f32.mrb[0].mxu0
  %v693 = vpop.f32.mrb[0].mxu0
  %v694 = vpop.f32.mrb[0].mxu0
  %695 = vdwg.mxu0
  %696 = vmatprep.subr.bf16.mxu0 0
  %697 = vmatpush1.bf16.msra.mxu0 %v544
  %698 = vmatprep.subr.bf16.mxu0 0
  %699 = vmatpush1.bf16.msra.mxu0 %v545
  %700 = vmatprep.subr.bf16.mxu0 0
  %701 = vmatpush1.bf16.msra.mxu0 %v546
  %702 = vmatprep.subr.bf16.mxu0 0
  %703 = vmatpush1.bf16.msra.mxu0 %v547
  %704 = vmatprep.subr.bf16.mxu0 0
  %705 = vmatpush1.bf16.msra.mxu0 %v548
  %706 = vmatprep.subr.bf16.mxu0 0
  %707 = vmatpush1.bf16.msra.mxu0 %v549
  %708 = vmatprep.subr.bf16.mxu0 0
  %709 = vmatpush1.bf16.msra.mxu0 %v550
  %710 = vmatprep.subr.bf16.mxu0 0
  %711 = vmatpush1.bf16.msra.mxu0 %v551
  %712 = vmatprep.subr.bf16.mxu0 0
  %713 = vmatpush1.bf16.msra.mxu0 %v552
  %714 = vmatprep.subr.bf16.mxu0 0
  %715 = vmatpush1.bf16.msra.mxu0 %v553
  %716 = vmatprep.subr.bf16.mxu0 0
  %717 = vmatpush1.bf16.msra.mxu0 %v554
  %718 = vmatprep.subr.bf16.mxu0 0
  %719 = vmatpush1.bf16.msra.mxu0 %v555
  %720 = vmatprep.subr.bf16.mxu0 0
  %721 = vmatpush1.bf16.msra.mxu0 %v556
  %722 = vmatprep.subr.bf16.mxu0 0
  %723 = vmatpush1.bf16.msra.mxu0 %v557
  %724 = vmatprep.subr.bf16.mxu0 0
  %725 = vmatpush1.bf16.msra.mxu0 %v558
  %726 = vmatprep.subr.bf16.mxu0 0
  %727 = vmatpush1.bf16.msra.mxu0 %v559
  %728 = vmatprep.mubr.bf16.mxu0 %v132
  %729 = vmatmul.mubr.bf16.gmra.mrb[0].mxu0 %v131
  %v730 = vpop.f32.mrb[0].mxu0
  %v731 = vadd.f32 %v691, %v730
  %v732 = vpop.f32.mrb[0].mxu0
  %v733 = vpop.f32.mrb[0].mxu0
  %v734 = vpop.f32.mrb[0].mxu0
  %735 = vdwg.mxu0
  %736 = vmatprep.subr.bf16.mxu0 0
  %737 = vmatpush1.bf16.msra.mxu0 %v560
  %738 = vmatprep.subr.bf16.mxu0 0
  %739 = vmatpush1.bf16.msra.mxu0 %v561
  %740 = vmatprep.subr.bf16.mxu0 0
  %741 = vmatpush1.bf16.msra.mxu0 %v562
  %742 = vmatprep.subr.bf16.mxu0 0
  %743 = vmatpush1.bf16.msra.mxu0 %v563
  %744 = vmatprep.subr.bf16.mxu0 0
  %745 = vmatpush1.bf16.msra.mxu0 %v564
  %746 = vmatprep.subr.bf16.mxu0 0
  %747 = vmatpush1.bf16.msra.mxu0 %v565
  %748 = vmatprep.subr.bf16.mxu0 0
  %749 = vmatpush1.bf16.msra.mxu0 %v566
  %750 = vmatprep.subr.bf16.mxu0 0
  %751 = vmatpush1.bf16.msra.mxu0 %v567
  %752 = vmatprep.subr.bf16.mxu0 0
  %753 = vmatpush1.bf16.msra.mxu0 %v568
  %754 = vmatprep.subr.bf16.mxu0 0
  %755 = vmatpush1.bf16.msra.mxu0 %v569
  %756 = vmatprep.subr.bf16.mxu0 0
  %757 = vmatpush1.bf16.msra.mxu0 %v570
  %758 = vmatprep.subr.bf16.mxu0 0
  %759 = vmatpush1.bf16.msra.mxu0 %v571
  %760 = vmatprep.subr.bf16.mxu0 0
  %761 = vmatpush1.bf16.msra.mxu0 %v572
  %762 = vmatprep.subr.bf16.mxu0 0
  %763 = vmatpush1.bf16.msra.mxu0 %v573
  %764 = vmatprep.subr.bf16.mxu0 0
  %765 = vmatpush1.bf16.msra.mxu0 %v574
  %766 = vmatprep.subr.bf16.mxu0 0
  %767 = vmatpush1.bf16.msra.mxu0 %v575
  %768 = vmatprep.mubr.bf16.mxu0 %v134
  %769 = vmatmul.mubr.bf16.gmra.mrb[0].mxu0 %v133
  %v770 = vpop.f32.mrb[0].mxu0
  %v771 = vadd.f32 %v731, %v770
  %v772 = vpop.f32.mrb[0].mxu0
  %v773 = vpop.f32.mrb[0].mxu0
  %v774 = vpop.f32.mrb[0].mxu0
  %775 = vdwg.mxu0
  %776 = vmatprep.subr.bf16.mxu0 0
  %777 = vmatpush1.bf16.msra.mxu0 %v576
  %778 = vmatprep.subr.bf16.mxu0 0
  %779 = vmatpush1.bf16.msra.mxu0 %v577
  %780 = vmatprep.subr.bf16.mxu0 0
  %781 = vmatpush1.bf16.msra.mxu0 %v578
  %782 = vmatprep.subr.bf16.mxu0 0
  %783 = vmatpush1.bf16.msra.mxu0 %v579
  %784 = vmatprep.subr.bf16.mxu0 0
  %785 = vmatpush1.bf16.msra.mxu0 %v580
  %786 = vmatprep.subr.bf16.mxu0 0
  %787 = vmatpush1.bf16.msra.mxu0 %v581
  %788 = vmatprep.subr.bf16.mxu0 0
  %789 = vmatpush1.bf16.msra.mxu0 %v582
  %790 = vmatprep.subr.bf16.mxu0 0
  %791 = vmatpush1.bf16.msra.mxu0 %v583
  %792 = vmatprep.subr.bf16.mxu0 0
  %793 = vmatpush1.bf16.msra.mxu0 %v584
  %794 = vmatprep.subr.bf16.mxu0 0
  %795 = vmatpush1.bf16.msra.mxu0 %v585
  %796 = vmatprep.subr.bf16.mxu0 0
  %797 = vmatpush1.bf16.msra.mxu0 %v586
  %798 = vmatprep.subr.bf16.mxu0 0
  %799 = vmatpush1.bf16.msra.mxu0 %v587
  %800 = vmatprep.subr.bf16.mxu0 0
  %801 = vmatpush1.bf16.msra.mxu0 %v588
  %802 = vmatprep.subr.bf16.mxu0 0
  %803 = vmatpush1.bf16.msra.mxu0 %v589
  %804 = vmatprep.subr.bf16.mxu0 0
  %805 = vmatpush1.bf16.msra.mxu0 %v590
  %806 = vmatprep.subr.bf16.mxu0 0
  %807 = vmatpush1.bf16.msra.mxu0 %v591
  %808 = vmatprep.mubr.bf16.mxu0 %v136
  %809 = vmatmul.mubr.bf16.gmra.mrb[0].mxu0 %v135
  %v810 = vpop.f32.mrb[0].mxu0
  %v811 = vadd.f32 %v771, %v810
  %v812 = vpop.f32.mrb[0].mxu0
  %v813 = vpop.f32.mrb[0].mxu0
  %v814 = vpop.f32.mrb[0].mxu0
  %815 = vdwg.mxu0
  %816 = vst [vmem:[%s5] sm:$0xff] %v811
  // Predicated region
  $region22: #{wrapper_model_forward.1} parent=0 // pred_check
    _
  $region23: #{wrapper_model_forward.1} parent=0 // pred_check_branch
    %818 = sbr.rel (0) target = $region25
  $region24: #{wrapper_model_forward.1} parent=0 // pred_region
    _
  $region25: #{wrapper_model_forward.1} parent=0 // pred_fallthru
    _
  // Predicated region
  $region26: #{wrapper_model_forward.1} parent=0 // pred_check
    _
  $region27: #{wrapper_model_forward.1} parent=0 // pred_check_branch
    %820 = sbr.rel (0) target = $region29
  $region28: #{wrapper_model_forward.1} parent=0 // pred_region
    _
  $region29: #{wrapper_model_forward.1} parent=0 // pred_fallthru
    _

</llo_original>
